<compile_context>
chip_gen: v7x
topology: tpu7x:2x2x1
jax: 0.10.0
libtpu: 0.0.40
codegen_flags: <defaults>
</compile_context>

<pallas_src>
import functools

import numpy as np

import jax
import jax.numpy as jnp
from jax.experimental import pallas as pl
from jax.experimental.pallas import tpu as pltpu


def _pad_to(n: int, mult: int) -> int:
    return ((n + mult - 1) // mult) * mult


@functools.lru_cache(maxsize=1)
def _vmem_capacity_bytes() -> int:
    """Per-generation VMEM capacity (128 MiB v5e/v6e, 64 MiB v7x per TC)."""
    try:
        cap = int(pltpu.get_tpu_info().vmem_capacity_bytes)
        if cap > 0:
            return cap
    except Exception:
        pass
    return 64 * 1024 * 1024          # conservative fallback (valid on v7x too)


def _probe_kernel(x_ref, o_ref):
    o_ref[...] = x_ref[...]


@functools.lru_cache(maxsize=1)
def _buffered_supported() -> bool:
    """Check once whether BlockSpec(pipeline_mode=pl.Buffered(1)) lowers here."""
    try:
        spec = pl.BlockSpec((8, 128), lambda i: (0, 0), pipeline_mode=pl.Buffered(1))
    except Exception:
        return False
    try:
        out = pl.pallas_call(
            _probe_kernel,
            out_shape=jax.ShapeDtypeStruct((8, 128), jnp.float32),
            grid=(1,),
            in_specs=[spec],
            out_specs=pl.BlockSpec((8, 128), lambda i: (0, 0)),
        )(jnp.zeros((8, 128), jnp.float32))
        jax.block_until_ready(out)
        return True
    except Exception:
        return False


def head_kernel(x_ref, w1_ref, b1_ref, w2_ref, b2_ref, o_ref, h_ref):
    # Compute the Tanhshrink intermediate once per M-tile (voc axis is the
    # inner, "arbitrary" grid axis that restarts at 0 for each M tile) and
    # cache it in VMEM scratch as bf16.
    @pl.when(pl.program_id(1) == 0)
    def _():
        h = jnp.dot(x_ref[...], w1_ref[...], preferred_element_type=jnp.float32)
        h = h + b1_ref[...]
        h = h - jnp.tanh(h)                    # Tanhshrink(x) = x - tanh(x)
        h_ref[...] = h.astype(h_ref.dtype)

    # Second Linear (BatchNorm eval-affine already folded into w2/b2).
    y = jnp.dot(h_ref[...], w2_ref[...], preferred_element_type=jnp.float32)
    o_ref[...] = (y + b2_ref[...]).astype(o_ref.dtype)


@functools.partial(
    jax.jit,
    static_argnames=("tile_m", "tile_n", "d_model_p", "hidden_p", "voc", "voc_p",
                     "out_dtype", "vmem_limit", "use_buffered", "w1_buffers"))
def _head_forward(x, w1p, b1p, w2p, b2p, *, tile_m, tile_n, d_model_p, hidden_p,
                  voc, voc_p, out_dtype, vmem_limit, use_buffered, w1_buffers):
    B, T, d_model = x.shape
    M = B * T
    M_p = _pad_to(M, tile_m)

    x2d = jnp.pad(x.reshape(M, d_model).astype(jnp.bfloat16),
                  ((0, M_p - M), (0, d_model_p - d_model)))

    def spec(shape, index_map, buffers=None):
        if buffers is not None and use_buffered:
            return pl.BlockSpec(shape, index_map, pipeline_mode=pl.Buffered(buffers))
        return pl.BlockSpec(shape, index_map)

    out2d = pl.pallas_call(
        head_kernel,
        out_shape=jax.ShapeDtypeStruct((M_p, voc_p), out_dtype),
        grid_spec=pltpu.PrefetchScalarGridSpec(
            num_scalar_prefetch=0,
            grid=(M_p // tile_m, voc_p // tile_n),
            in_specs=[
                pl.BlockSpec((tile_m, d_model_p), lambda i, j: (i, 0)),        # x rows
                spec((d_model_p, hidden_p), lambda i, j: (0, 0), w1_buffers),  # W1 (resident, single-buffered)
                spec((1, hidden_p), lambda i, j: (0, 0), w1_buffers),          # b1
                pl.BlockSpec((hidden_p, tile_n), lambda i, j: (0, j)),         # W2 voc-tile (streamed)
                pl.BlockSpec((1, tile_n), lambda i, j: (0, j)),                # b2 voc-tile
            ],
            out_specs=pl.BlockSpec((tile_m, tile_n), lambda i, j: (i, j)),
            scratch_shapes=[pltpu.VMEM((tile_m, hidden_p), jnp.bfloat16)],
        ),
        compiler_params=pltpu.CompilerParams(
            dimension_semantics=("parallel", "arbitrary"),
            vmem_limit_bytes=vmem_limit,
        ),
    )(x2d, w1p, b1p, w2p, b2p)

    return out2d[:M, :voc].reshape(B, T, voc)


class PallasHead:
    """Eval-mode forward of `Head` with one-time parameter preparation.

    BatchNorm1d (eval) is folded into the second Linear; weights are padded to
    lane/MXU-friendly shapes and cast to bf16 exactly once at construction.
    """

    def __init__(self, w1, b1, gamma, beta, running_mean, running_var, w2, b2,
                 *, eps=1e-5, out_dtype=None):
        d_model, hidden = w1.shape
        voc = w2.shape[1]
        self.d_model, self.hidden, self.voc = d_model, hidden, voc
        self.out_dtype = out_dtype

        # --- One-time BatchNorm(eval) fold into the second Linear ----------
        scale = gamma / jnp.sqrt(running_var + eps)     # (hidden,)
        shift = beta - running_mean * scale             # (hidden,)
        w2f = scale[:, None] * w2                       # (hidden, voc)
        b2f = b2 + shift @ w2                           # (voc,)

        # --- Per-generation geometry ----------------------------------------
        self.vmem_cap = _vmem_capacity_bytes()
        self.gen_vmem_limit = int(self.vmem_cap * 0.8)      # ~100 MiB on v5e/v6e, ~51 MiB on v7x
        self.use_buffered = _buffered_supported()
        self.w1_buffers = 1 if self.use_buffered else 2      # grid-invariant operand
        self.w2_buffers = 2                                   # streamed voc tiles (default)

        self.d_model_p = _pad_to(d_model, 128)
        self.hidden_p = _pad_to(hidden, 128)

        budget = int(self.vmem_cap * 0.75)
        tile_n = min(512, _pad_to(voc, 128))
        while tile_n > 128 and self.w2_buffers * self.hidden_p * tile_n * 2 > budget // 3:
            tile_n -= 128
        self.tile_n = tile_n
        self.voc_p = _pad_to(voc, tile_n)

        # --- One-time padding + bf16 cast of the (folded) parameters --------
        self.w1p = jnp.pad(w1, ((0, self.d_model_p - d_model),
                                (0, self.hidden_p - hidden))).astype(jnp.bfloat16)
        self.b1p = jnp.pad(b1, (0, self.hidden_p - hidden)
                           ).reshape(1, self.hidden_p).astype(jnp.float32)
        self.w2p = jnp.pad(w2f, ((0, self.hidden_p - hidden),
                                 (0, self.voc_p - voc))).astype(jnp.bfloat16)
        self.b2p = jnp.pad(b2f, (0, self.voc_p - voc)
                           ).reshape(1, self.voc_p).astype(jnp.float32)

    def _plan(self, M: int, out_bytes: int):
        """Pick tile_m and a vmem limit for this generation's VMEM capacity."""
        budget = int(self.vmem_cap * 0.75)
        fixed = (self.w1_buffers * self.d_model_p * self.hidden_p * 2   # W1 (bf16)
                 + self.w1_buffers * 8 * self.hidden_p * 4              # b1 (sublane-padded f32)
                 + self.w2_buffers * self.hidden_p * self.tile_n * 2    # W2 tiles (bf16)
                 + self.w2_buffers * 8 * self.tile_n * 4)               # b2 tiles
        per_row = (2 * self.d_model_p * 2          # x tiles (bf16, double-buffered)
                   + 2 * self.tile_n * out_bytes   # output tiles (double-buffered)
                   + self.hidden_p * 2)            # h scratch (bf16)
        cap_rows = (budget - fixed) // max(per_row, 1)
        m_cap = _pad_to(M, 256)                    # 256-multiple clamp for small M
        tile_m = 128
        for cand in (1024, 512, 256, 128):
            if cand <= cap_rows and cand <= m_cap:
                tile_m = cand
                break
        est = (fixed
               + 2 * tile_m * self.d_model_p * 2
               + 2 * tile_m * self.tile_n * out_bytes
               + tile_m * self.hidden_p * 2)
        vmem_limit = int(min(self.gen_vmem_limit, max(32 << 20, est + est // 2)))
        return tile_m, vmem_limit

    def __call__(self, x):
        B, T, d = x.shape
        assert d == self.d_model
        out_dtype = (np.dtype(self.out_dtype) if self.out_dtype is not None
                     else np.dtype(x.dtype))
        tile_m, vmem_limit = self._plan(B * T, out_dtype.itemsize)
        return _head_forward(
            x, self.w1p, self.b1p, self.w2p, self.b2p,
            tile_m=tile_m, tile_n=self.tile_n,
            d_model_p=self.d_model_p, hidden_p=self.hidden_p,
            voc=self.voc, voc_p=self.voc_p,
            out_dtype=out_dtype, vmem_limit=vmem_limit,
            use_buffered=self.use_buffered, w1_buffers=self.w1_buffers)


def reference_forward(x, w1, b1, gamma, beta, running_mean, running_var, w2, b2,
                      eps=1e-5):
    h = jnp.einsum("btd,dh->bth", x, w1) + b1
    h = h - jnp.tanh(h)
    scale = gamma / jnp.sqrt(running_var + eps)
    shift = beta - running_mean * scale
    h = h * scale + shift
    return jnp.einsum("bth,hv->btv", h, w2) + b2


if __name__ == "__main__":
    # Small shapes: batch=2, seq=8, d_model=32, voc_size=96 -> hidden = 96//3 = 32
    B, T, d_model, voc_size = 2, 8, 32, 96
    hidden = voc_size // 3
    eps = 1e-5

    key = jax.random.PRNGKey(0)
    k_x, k_w1, k_w2, k_g, k_b, k_m, k_v = jax.random.split(key, 7)

    x = jax.random.normal(k_x, (B, T, d_model), dtype=jnp.float32)

    # Xavier-uniform-like Linear weights, zero biases (mirrors Head.init_weights()).
    lim1 = (6.0 / (d_model + hidden)) ** 0.5
    w1 = jax.random.uniform(k_w1, (d_model, hidden), minval=-lim1, maxval=lim1,
                            dtype=jnp.float32)
    b1 = jnp.zeros((hidden,), jnp.float32)
    lim2 = (6.0 / (hidden + voc_size)) ** 0.5
    w2 = jax.random.uniform(k_w2, (hidden, voc_size), minval=-lim2, maxval=lim2,
                            dtype=jnp.float32)
    b2 = jnp.zeros((voc_size,), jnp.float32)

    # BatchNorm1d (eval mode) parameters / running stats, non-trivial values.
    gamma = 1.0 + 0.1 * jax.random.normal(k_g, (hidden,), dtype=jnp.float32)
    beta = 0.1 * jax.random.normal(k_b, (hidden,), dtype=jnp.float32)
    running_mean = 0.1 * jax.random.normal(k_m, (hidden,), dtype=jnp.float32)
    running_var = 1.0 + 0.1 * jax.random.uniform(k_v, (hidden,), dtype=jnp.float32)

    # One-time parameter prep (BN fold + pad + bf16 cast), then fast forward.
    head = PallasHead(w1, b1, gamma, beta, running_mean, running_var, w2, b2, eps=eps)
    out = head(x)
    out = jax.block_until_ready(out)

    ref = reference_forward(x, w1, b1, gamma, beta, running_mean, running_var,
                            w2, b2, eps=eps)
    assert out.shape == (B, T, voc_size)
    # bf16 MXU inputs with f32 accumulation -> loosen tolerance vs f32 reference.
    assert jnp.allclose(out, ref, atol=5e-2, rtol=5e-2), "mismatch vs reference"

    print("KERNEL_OK")
</pallas_src>

<mosaic_0001>
module attributes {stable_mosaic.version = 11 : i64} {
  func.func @_probe_kernel(%arg0: i32, %arg1: memref<8x128xf32, #tpu.memory_space<vmem>>, %arg2: memref<8x128xf32, #tpu.memory_space<vmem>>) attributes {dimension_semantics = [#tpu.dimension_semantics<arbitrary>], iteration_bounds = array<i64: 1>, scalar_prefetch = 0 : i64, scratch_operands = 0 : i64, tpu.core_type = #tpu.core_type<tc>, window_params = [{pipeline_mode = #tpu.pipeline_mode<synchronous>, transform_indices = @transform_0, window_bounds = array<i64: 8, 128>}, {pipeline_mode = #tpu.pipeline_mode<synchronous>, transform_indices = @transform_1, window_bounds = array<i64: 8, 128>}]} {
    %c0 = arith.constant 0 : index
    %c0_0 = arith.constant 0 : index
    %0 = vector.load %arg1[%c0, %c0_0] : memref<8x128xf32, #tpu.memory_space<vmem>>, vector<8x128xf32>
    %c0_1 = arith.constant 0 : index
    %c0_2 = arith.constant 0 : index
    %1 = vector.load %arg2[%c0_1, %c0_2] : memref<8x128xf32, #tpu.memory_space<vmem>>, vector<8x128xf32>
    tpu.vector_store %arg2[%c0_1, %c0_2], %0 {strides = array<i32>} : memref<8x128xf32, #tpu.memory_space<vmem>>, vector<8x128xf32>,
    return
  }
  func.func @transform_0(%arg0: i32) -> (i32, i32) {
    %c0_i32 = arith.constant 0 : i32
    %c0_i32_0 = arith.constant 0 : i32
    %c0_i32_1 = arith.constant 0 : i32
    return %c0_i32, %c0_i32_0 : i32, i32
  }
  func.func @transform_1(%arg0: i32) -> (i32, i32) {
    %c0_i32 = arith.constant 0 : i32
    %c0_i32_0 = arith.constant 0 : i32
    %c0_i32_1 = arith.constant 0 : i32
    return %c0_i32, %c0_i32_0 : i32, i32
  }
}

module attributes {stable_mosaic.version = 11 : i64} {
  func.func @head_kernel(%arg0: i32, %arg1: i32, %arg2: memref<256x128xbf16, #tpu.memory_space<vmem>>, %arg3: memref<128x128xbf16, #tpu.memory_space<vmem>>, %arg4: memref<1x128xf32, #tpu.memory_space<vmem>>, %arg5: memref<128x128xbf16, #tpu.memory_space<vmem>>, %arg6: memref<1x128xf32, #tpu.memory_space<vmem>>, %arg7: memref<256x128xf32, #tpu.memory_space<vmem>>, %arg8: memref<256x128xbf16, #tpu.memory_space<vmem>>) attributes {dimension_semantics = [#tpu.dimension_semantics<parallel>, #tpu.dimension_semantics<arbitrary>], iteration_bounds = array<i64: 1, 1>, scalar_prefetch = 0 : i64, scratch_operands = 1 : i64, tpu.core_type = #tpu.core_type<tc>, window_params = [{transform_indices = @transform_0, window_bounds = array<i64: 256, 128>}, {pipeline_mode = #tpu.pipeline_mode<synchronous>, transform_indices = @transform_1, window_bounds = array<i64: 128, 128>}, {pipeline_mode = #tpu.pipeline_mode<synchronous>, transform_indices = @transform_2, window_bounds = array<i64: 1, 128>}, {transform_indices = @transform_3, window_bounds = array<i64: 128, 128>}, {transform_indices = @transform_4, window_bounds = array<i64: 1, 128>}, {transform_indices = @transform_5, window_bounds = array<i64: 256, 128>}]} {
    %c0_i32 = arith.constant 0 : i32
    %0 = arith.cmpi eq, %arg1, %c0_i32 : i32
    %1 = arith.extui %0 : i1 to i32
    %c0_i32_0 = arith.constant 0 : i32
    %2 = arith.cmpi ne, %1, %c0_i32_0 : i32
    scf.if %2 {
      %c0_8 = arith.constant 0 : index
      %c0_9 = arith.constant 0 : index
      %10 = vector.load %arg2[%c0_8, %c0_9] : memref<256x128xbf16, #tpu.memory_space<vmem>>, vector<256x128xbf16>
      %c0_10 = arith.constant 0 : index
      %c0_11 = arith.constant 0 : index
      %11 = vector.load %arg3[%c0_10, %c0_11] : memref<128x128xbf16, #tpu.memory_space<vmem>>, vector<128x128xbf16>
      %cst_12 = arith.constant dense<0.000000e+00> : vector<256x128xf32>
      %12 = tpu.matmul %10, %11, %cst_12 {dimension_numbers = #tpu.dot_dimension_numbers<[1], [0], [0], [1], [0, 0, 1, 1], [], []>} : vector<256x128xbf16>, vector<128x128xbf16>, vector<256x128xf32> -> vector<256x128xf32>
      %c0_13 = arith.constant 0 : index
      %c0_14 = arith.constant 0 : index
      %13 = vector.load %arg4[%c0_13, %c0_14] : memref<1x128xf32, #tpu.memory_space<vmem>>, vector<1x128xf32>
      %14 = vector.broadcast %13 : vector<1x128xf32> to vector<256x128xf32>
      %15 = arith.addf %12, %14 : vector<256x128xf32>
      %16 = math.tanh %15 : vector<256x128xf32>
      %17 = arith.subf %15, %16 : vector<256x128xf32>
      %18 = arith.truncf %17 : vector<256x128xf32> to vector<256x128xbf16>
      %c0_15 = arith.constant 0 : index
      %c0_16 = arith.constant 0 : index
      %19 = vector.load %arg8[%c0_15, %c0_16] : memref<256x128xbf16, #tpu.memory_space<vmem>>, vector<256x128xbf16>
      tpu.vector_store %arg8[%c0_15, %c0_16], %18 {strides = array<i32>} : memref<256x128xbf16, #tpu.memory_space<vmem>>, vector<256x128xbf16>,
    } else {
    }
    %c0 = arith.constant 0 : index
    %c0_1 = arith.constant 0 : index
    %3 = vector.load %arg8[%c0, %c0_1] : memref<256x128xbf16, #tpu.memory_space<vmem>>, vector<256x128xbf16>
    %c0_2 = arith.constant 0 : index
    %c0_3 = arith.constant 0 : index
    %4 = vector.load %arg5[%c0_2, %c0_3] : memref<128x128xbf16, #tpu.memory_space<vmem>>, vector<128x128xbf16>
    %cst = arith.constant dense<0.000000e+00> : vector<256x128xf32>
    %5 = tpu.matmul %3, %4, %cst {dimension_numbers = #tpu.dot_dimension_numbers<[1], [0], [0], [1], [0, 0, 1, 1], [], []>} : vector<256x128xbf16>, vector<128x128xbf16>, vector<256x128xf32> -> vector<256x128xf32>
    %c0_4 = arith.constant 0 : index
    %c0_5 = arith.constant 0 : index
    %6 = vector.load %arg6[%c0_4, %c0_5] : memref<1x128xf32, #tpu.memory_space<vmem>>, vector<1x128xf32>
    %7 = vector.broadcast %6 : vector<1x128xf32> to vector<256x128xf32>
    %8 = arith.addf %5, %7 : vector<256x128xf32>
    %c0_6 = arith.constant 0 : index
    %c0_7 = arith.constant 0 : index
    %9 = vector.load %arg7[%c0_6, %c0_7] : memref<256x128xf32, #tpu.memory_space<vmem>>, vector<256x128xf32>
    tpu.vector_store %arg7[%c0_6, %c0_7], %8 {strides = array<i32>} : memref<256x128xf32, #tpu.memory_space<vmem>>, vector<256x128xf32>,
    return
  }
  func.func @transform_0(%arg0: i32, %arg1: i32) -> (i32, i32) {
    %c0_i32 = arith.constant 0 : i32
    %c0_i32_0 = arith.constant 0 : i32
    return %arg0, %c0_i32 : i32, i32
  }
  func.func @transform_1(%arg0: i32, %arg1: i32) -> (i32, i32) {
    %c0_i32 = arith.constant 0 : i32
    %c0_i32_0 = arith.constant 0 : i32
    %c0_i32_1 = arith.constant 0 : i32
    return %c0_i32, %c0_i32_0 : i32, i32
  }
  func.func @transform_2(%arg0: i32, %arg1: i32) -> (i32, i32) {
    %c0_i32 = arith.constant 0 : i32
    %c0_i32_0 = arith.constant 0 : i32
    %c0_i32_1 = arith.constant 0 : i32
    return %c0_i32, %c0_i32_0 : i32, i32
  }
  func.func @transform_3(%arg0: i32, %arg1: i32) -> (i32, i32) {
    %c0_i32 = arith.constant 0 : i32
    %c0_i32_0 = arith.constant 0 : i32
    return %c0_i32, %arg1 : i32, i32
  }
  func.func @transform_4(%arg0: i32, %arg1: i32) -> (i32, i32) {
    %c0_i32 = arith.constant 0 : i32
    %c0_i32_0 = arith.constant 0 : i32
    return %c0_i32, %arg1 : i32, i32
  }
  func.func @transform_5(%arg0: i32, %arg1: i32) -> (i32, i32) {
    %c0_i32 = arith.constant 0 : i32
    return %arg0, %arg1 : i32, i32
  }
}

</mosaic_0001>

<llo_original>
// kernel: tpu_custom_call.1
$region0: #{tpu_custom_call.1}
  #allocation0 [shape = 'u32[]', space=smem, size = 0x4, offset = 0x4, fixed_abs, tag = 'smem constant byte address 0x4 - core index']
  #allocation1 [shape = 'u32[144,128]{1,0:T(1,128)}', space=vmem, size = 0x12000, scoped, tag = 'internal scratch']
  %s0 = inlined_call_operand.hbm [shape: f32[8,128], index: 0, kind: input, shape index: {}]
  %s1 = inlined_call_operand.hbm [shape: f32[8,128], index: 1, kind: output, shape index: {}]
  %s2 = sld [smem:[#allocation0]]
  $region18: #{tpu_custom_call.1} parent=0
    _
  %s4 = ssub.s32 1, %s2
  %s5 = scalar_select 0, %s4, %s2
  $region1: #{tpu_custom_call.1} parent=0
    #allocation2 [shape = 'u8[4096]{0}', space=vmem, size = 0x1000, scoped, tag = 'input window, operand 0, single buffered']
    #allocation3 [shape = 's32[1]{0}', space=sflag, size = 0x4, scoped, tag = 'scoped memory for tpu_custom_call.1']
    #allocation4 [shape = 's32[1]{0}', space=sflag, size = 0x4, scoped, tag = 'scoped memory for tpu_custom_call.1']
    #allocation5 [shape = 'u8[4096]{0}', space=vmem, size = 0x1000, scoped, tag = 'output window, operand 0, single buffered']
    %6 = vsyncpa [#allocation3], 0
    %7 = vsyncpa [#allocation4], 0
    // Predicated region
    $region2: #{tpu_custom_call.1} parent=1 // pred_check
      _
    $region3: #{tpu_custom_call.1} parent=1 // pred_check_branch
      %9 = sbr.rel (0) target = $region5
    $region4: #{tpu_custom_call.1} parent=1 // pred_region
      %s11 = ssub.s32 128, 128
      %12 = vsyncadd [#allocation3], %s11
      %s14 = sshll.u32 [#allocation2], 4
      %s15 = int_to_ptr.vmem [resolvable:$true] %s14
      %17 = dma.hbm_to_vmem [thread:$0]  %s0, 128, %s15, [#allocation3]
    $region5: #{tpu_custom_call.1} parent=1 // pred_fallthru
      _
    // Predicated region
    $region6: #{tpu_custom_call.1} parent=1 // pred_check
      _
    $region7: #{tpu_custom_call.1} parent=1 // pred_check_branch
      %19 = sbr.rel (0) target = $region9
    $region8: #{tpu_custom_call.1} parent=1 // pred_region
      %20 = dma.done [#allocation3], 128
    $region9: #{tpu_custom_call.1} parent=1 // pred_fallthru
      _
    %v21 = vld [vmem:[#allocation2] sm:$0xff]
    %22 = vst [vmem:[#allocation5] sm:$0xff] %v21
    // Predicated region
    $region10: #{tpu_custom_call.1} parent=1 // pred_check
      _
    $region11: #{tpu_custom_call.1} parent=1 // pred_check_branch
      %24 = sbr.rel (0) target = $region13
    $region12: #{tpu_custom_call.1} parent=1 // pred_region
      %s26 = ssub.s32 128, 128
      %27 = vsyncadd [#allocation4], %s26
      %s29 = sshll.u32 [#allocation5], 4
      %s30 = int_to_ptr.vmem [resolvable:$true] %s29
      %32 = dma.vmem_to_hbm [thread:$0]  %s30, 128, %s1, [#allocation4]
    $region13: #{tpu_custom_call.1} parent=1 // pred_fallthru
      _
    // Predicated region
    $region14: #{tpu_custom_call.1} parent=1 // pred_check
      _
    $region15: #{tpu_custom_call.1} parent=1 // pred_check_branch
      %34 = sbr.rel (0) target = $region17
    $region16: #{tpu_custom_call.1} parent=1 // pred_region
      %35 = dma.done [#allocation4], 128
    $region17: #{tpu_custom_call.1} parent=1 // pred_fallthru
      _
    %36 = vsyncpa [#allocation3], 1
    %37 = vsyncpa [#allocation4], 1

// kernel: _head_forward.1
$region0: #{_head_forward.1}
  #allocation0 [shape = 'u32[]', space=smem, size = 0x4, offset = 0x4, fixed_abs, tag = 'smem constant byte address 0x4 - core index']
  #allocation1 [shape = 'u32[144,128]{1,0:T(1,128)}', space=vmem, size = 0x12000, scoped, tag = 'internal scratch']
  #allocation2 [shape = 'bf16[256,128]{1,0:T(16,128)(2,1)}', space=vmem, size = 0x10000, scoped, tag = 'scratch operand']
  %s0 = inlined_call_operand.vmem [shape: bf16[256,128], index: 0, kind: input, shape index: {}]
  %s1 = inlined_call_operand.vmem [shape: bf16[128,128], index: 1, kind: input, shape index: {}]
  %s2 = inlined_call_operand.vmem [shape: f32[1,128], index: 2, kind: input, shape index: {}]
  %s3 = inlined_call_operand.vmem [shape: bf16[128,128], index: 3, kind: input, shape index: {}]
  %s4 = inlined_call_operand.vmem [shape: f32[1,128], index: 4, kind: input, shape index: {}]
  %s5 = inlined_call_operand.vmem [shape: f32[256,128], index: 5, kind: output, shape index: {}]
  %s6 = sld [smem:[#allocation0]]
  $region34: #{_head_forward.1} parent=0
    _
  %s8 = ssub.s32 1, %s6
  %s9 = scalar_select 0, %s8, %s6
  // Predicated region
  $region2: #{_head_forward.1} parent=0 // pred_check
    _
  $region3: #{_head_forward.1} parent=0 // pred_check_branch
    %11 = sbr.rel (0) target = $region5
  $region4: #{_head_forward.1} parent=0 // pred_region
    _
  $region5: #{_head_forward.1} parent=0 // pred_fallthru
    _
  // Predicated region
  $region6: #{_head_forward.1} parent=0 // pred_check
    _
  $region7: #{_head_forward.1} parent=0 // pred_check_branch
    %13 = sbr.rel (0) target = $region9
  $region8: #{_head_forward.1} parent=0 // pred_region
    _
  $region9: #{_head_forward.1} parent=0 // pred_fallthru
    _
  // Predicated region
  $region10: #{_head_forward.1} parent=0 // pred_check
    _
  $region11: #{_head_forward.1} parent=0 // pred_check_branch
    %15 = sbr.rel (0) target = $region13
  $region12: #{_head_forward.1} parent=0 // pred_region
    _
  $region13: #{_head_forward.1} parent=0 // pred_fallthru
    _
  // Predicated region
  $region14: #{_head_forward.1} parent=0 // pred_check
    _
  $region15: #{_head_forward.1} parent=0 // pred_check_branch
    %17 = sbr.rel (0) target = $region17
  $region16: #{_head_forward.1} parent=0 // pred_region
    _
  $region17: #{_head_forward.1} parent=0 // pred_fallthru
    _
  // Predicated region
  $region18: #{_head_forward.1} parent=0 // pred_check
    _
  $region19: #{_head_forward.1} parent=0 // pred_check_branch
    %19 = sbr.rel (0) target = $region21
  $region20: #{_head_forward.1} parent=0 // pred_region
    _
  $region21: #{_head_forward.1} parent=0 // pred_fallthru
    _
  %p21 = scmp.eq.s32.totalorder 0, 0
  // Predicated region
  $region22: #{_head_forward.1} parent=0 // pred_check
    %p22 = pneg %p21
  $region23: #{_head_forward.1} parent=0 // pred_check_branch
    %24 = sbr.rel (%p22) target = $region25
  $region24: #{_head_forward.1} parent=0 // pred_region
    %v25 = vld [vmem:[%s0] sm:$0xf]
    %v26 = vld [vmem:[%s0 + $0x4] sm:$0xf]
    %v27 = vld [vmem:[%s0 + $0x8] sm:$0xf]
    %v28 = vld [vmem:[%s0 + $0xc] sm:$0xf]
    %v29 = vld [vmem:[%s0 + $0x10] sm:$0xf]
    %v30 = vld [vmem:[%s0 + $0x14] sm:$0xf]
    %v31 = vld [vmem:[%s0 + $0x18] sm:$0xf]
    %v32 = vld [vmem:[%s0 + $0x1c] sm:$0xf]
    %v33 = vld [vmem:[%s0 + $0x20] sm:$0xf]
    %v34 = vld [vmem:[%s0 + $0x24] sm:$0xf]
    %v35 = vld [vmem:[%s0 + $0x28] sm:$0xf]
    %v36 = vld [vmem:[%s0 + $0x2c] sm:$0xf]
    %v37 = vld [vmem:[%s0 + $0x30] sm:$0xf]
    %v38 = vld [vmem:[%s0 + $0x34] sm:$0xf]
    %v39 = vld [vmem:[%s0 + $0x38] sm:$0xf]
    %v40 = vld [vmem:[%s0 + $0x3c] sm:$0xf]
    %v41 = vld [vmem:[%s0 + $0x40] sm:$0xf]
    %v42 = vld [vmem:[%s0 + $0x44] sm:$0xf]
    %v43 = vld [vmem:[%s0 + $0x48] sm:$0xf]
    %v44 = vld [vmem:[%s0 + $0x4c] sm:$0xf]
    %v45 = vld [vmem:[%s0 + $0x50] sm:$0xf]
    %v46 = vld [vmem:[%s0 + $0x54] sm:$0xf]
    %v47 = vld [vmem:[%s0 + $0x58] sm:$0xf]
    %v48 = vld [vmem:[%s0 + $0x5c] sm:$0xf]
    %v49 = vld [vmem:[%s0 + $0x60] sm:$0xf]
    %v50 = vld [vmem:[%s0 + $0x64] sm:$0xf]
    %v51 = vld [vmem:[%s0 + $0x68] sm:$0xf]
    %v52 = vld [vmem:[%s0 + $0x6c] sm:$0xf]
    %v53 = vld [vmem:[%s0 + $0x70] sm:$0xf]
    %v54 = vld [vmem:[%s0 + $0x74] sm:$0xf]
    %v55 = vld [vmem:[%s0 + $0x78] sm:$0xf]
    %v56 = vld [vmem:[%s0 + $0x7c] sm:$0xf]
    %v57 = vld [vmem:[%s1] sm:$0xf]
    %v58 = vld [vmem:[%s1 + $0x4] sm:$0xf]
    %v59 = vld [vmem:[%s1 + $0x8] sm:$0xf]
    %v60 = vld [vmem:[%s1 + $0xc] sm:$0xf]
    %v61 = vld [vmem:[%s1 + $0x10] sm:$0xf]
    %v62 = vld [vmem:[%s1 + $0x14] sm:$0xf]
    %v63 = vld [vmem:[%s1 + $0x18] sm:$0xf]
    %v64 = vld [vmem:[%s1 + $0x1c] sm:$0xf]
    %v65 = vld [vmem:[%s1 + $0x20] sm:$0xf]
    %v66 = vld [vmem:[%s1 + $0x24] sm:$0xf]
    %v67 = vld [vmem:[%s1 + $0x28] sm:$0xf]
    %v68 = vld [vmem:[%s1 + $0x2c] sm:$0xf]
    %v69 = vld [vmem:[%s1 + $0x30] sm:$0xf]
    %v70 = vld [vmem:[%s1 + $0x34] sm:$0xf]
    %v71 = vld [vmem:[%s1 + $0x38] sm:$0xf]
    %v72 = vld [vmem:[%s1 + $0x3c] sm:$0xf]
    %v73 = vld [vmem:[%s2] sm:$0x1]
    %v75 = vlaneseq
    %v76 = vshrl.u32 %v75, 7
    %v77 = vsub.s32 0, %v76
    %v78 = vrot.slane %v73, %v77
    %v112 = vunpack.c.l.b16 %v25
    %v113 = vunpack.c.l.b16 %v26
    %v114 = vunpack.c.l.b16 %v27
    %v115 = vunpack.c.l.b16 %v28
    %v116 = vunpack.c.l.b16 %v29
    %v117 = vunpack.c.l.b16 %v30
    %v118 = vunpack.c.l.b16 %v31
    %v119 = vunpack.c.l.b16 %v32
    %v120 = vunpack.c.l.b16 %v33
    %v121 = vunpack.c.l.b16 %v34
    %v122 = vunpack.c.l.b16 %v35
    %v123 = vunpack.c.l.b16 %v36
    %v124 = vunpack.c.l.b16 %v37
    %v125 = vunpack.c.l.b16 %v38
    %v126 = vunpack.c.l.b16 %v39
    %v127 = vunpack.c.l.b16 %v40
    %v128 = vunpack.c.l.b16 %v41
    %v129 = vunpack.c.l.b16 %v42
    %v130 = vunpack.c.l.b16 %v43
    %v131 = vunpack.c.l.b16 %v44
    %v132 = vunpack.c.l.b16 %v45
    %v133 = vunpack.c.l.b16 %v46
    %v134 = vunpack.c.l.b16 %v47
    %v135 = vunpack.c.l.b16 %v48
    %v136 = vunpack.c.l.b16 %v49
    %v137 = vunpack.c.l.b16 %v50
    %v138 = vunpack.c.l.b16 %v51
    %v139 = vunpack.c.l.b16 %v52
    %v140 = vunpack.c.l.b16 %v53
    %v141 = vunpack.c.l.b16 %v54
    %v142 = vunpack.c.l.b16 %v55
    %v143 = vunpack.c.l.b16 %v56
    %v144 = vpack.c.b16 %v113, %v112
    %v145 = vpack.c.b16 %v115, %v114
    %v146 = vpack.c.b16 %v117, %v116
    %v147 = vpack.c.b16 %v119, %v118
    %v148 = vpack.c.b16 %v121, %v120
    %v149 = vpack.c.b16 %v123, %v122
    %v150 = vpack.c.b16 %v125, %v124
    %v151 = vpack.c.b16 %v127, %v126
    %v152 = vpack.c.b16 %v129, %v128
    %v153 = vpack.c.b16 %v131, %v130
    %v154 = vpack.c.b16 %v133, %v132
    %v155 = vpack.c.b16 %v135, %v134
    %v156 = vpack.c.b16 %v137, %v136
    %v157 = vpack.c.b16 %v139, %v138
    %v158 = vpack.c.b16 %v141, %v140
    %v159 = vpack.c.b16 %v143, %v142
    %v192 = vunpack.c.l.b16 %v57
    %v193 = vunpack.c.l.b16 %v58
    %v194 = vunpack.c.l.b16 %v59
    %v195 = vunpack.c.l.b16 %v60
    %v196 = vunpack.c.l.b16 %v61
    %v197 = vunpack.c.l.b16 %v62
    %v198 = vunpack.c.l.b16 %v63
    %v199 = vunpack.c.l.b16 %v64
    %v200 = vunpack.c.l.b16 %v65
    %v201 = vunpack.c.l.b16 %v66
    %v202 = vunpack.c.l.b16 %v67
    %v203 = vunpack.c.l.b16 %v68
    %v204 = vunpack.c.l.b16 %v69
    %v205 = vunpack.c.l.b16 %v70
    %v206 = vunpack.c.l.b16 %v71
    %v207 = vunpack.c.l.b16 %v72
    %v208 = vpack.c.b16 %v193, %v192
    %v209 = vpack.c.b16 %v195, %v194
    %v210 = vpack.c.b16 %v197, %v196
    %v211 = vpack.c.b16 %v199, %v198
    %v212 = vpack.c.b16 %v201, %v200
    %v213 = vpack.c.b16 %v203, %v202
    %v214 = vpack.c.b16 %v205, %v204
    %v215 = vpack.c.b16 %v207, %v206
    %224 = vmatprep.subr.bf16.mxu0 0
    %225 = vmatpush1.bf16.msra.mxu0 %v208
    %226 = vmatprep.subr.bf16.mxu0 0
    %227 = vmatpush1.bf16.msra.mxu0 %v209
    %228 = vmatprep.subr.bf16.mxu0 0
    %229 = vmatpush1.bf16.msra.mxu0 %v210
    %230 = vmatprep.subr.bf16.mxu0 0
    %231 = vmatpush1.bf16.msra.mxu0 %v211
    %232 = vmatprep.subr.bf16.mxu0 0
    %233 = vmatpush1.bf16.msra.mxu0 %v212
    %234 = vmatprep.subr.bf16.mxu0 0
    %235 = vmatpush1.bf16.msra.mxu0 %v213
    %236 = vmatprep.subr.bf16.mxu0 0
    %237 = vmatpush1.bf16.msra.mxu0 %v214
    %238 = vmatprep.subr.bf16.mxu0 0
    %239 = vmatpush1.bf16.msra.mxu0 %v215
    %240 = vmatprep.subr.bf16.mxu0 0
    %241 = vmatpush1.bf16.msra.mxu0 0
    %242 = vmatprep.subr.bf16.mxu0 0
    %243 = vmatpush1.bf16.msra.mxu0 0
    %244 = vmatprep.subr.bf16.mxu0 0
    %245 = vmatpush1.bf16.msra.mxu0 0
    %246 = vmatprep.subr.bf16.mxu0 0
    %247 = vmatpush1.bf16.msra.mxu0 0
    %248 = vmatprep.subr.bf16.mxu0 0
    %249 = vmatpush1.bf16.msra.mxu0 0
    %250 = vmatprep.subr.bf16.mxu0 0
    %251 = vmatpush1.bf16.msra.mxu0 0
    %252 = vmatprep.subr.bf16.mxu0 0
    %253 = vmatpush1.bf16.msra.mxu0 0
    %254 = vmatprep.subr.bf16.mxu0 0
    %255 = vmatpush1.bf16.msra.mxu0 0
    %256 = vmatprep.mubr.bf16.mxu0 0
    %257 = vmatmul.mubr.bf16.gmra.mrb[0].mxu0 %v144
    %v258 = vpop.f32.mrb[0].mxu0
    %v259 = vadd.f32 %v78, %v258
    %v260 = vpop.f32.mrb[0].mxu0
    %v261 = vpop.f32.mrb[0].mxu0
    %v262 = vadd.f32 %v78, %v261
    %v263 = vpop.f32.mrb[0].mxu0
    %264 = vmatprep.mubr.bf16.mxu0 0
    %265 = vmatmul.mubr.bf16.gmra.mrb[0].mxu0 %v145
    %v266 = vpop.f32.mrb[0].mxu0
    %v267 = vadd.f32 %v78, %v266
    %v268 = vpop.f32.mrb[0].mxu0
    %v269 = vpop.f32.mrb[0].mxu0
    %v270 = vadd.f32 %v78, %v269
    %v271 = vpop.f32.mrb[0].mxu0
    %272 = vmatprep.mubr.bf16.mxu0 0
    %273 = vmatmul.mubr.bf16.gmra.mrb[0].mxu0 %v146
    %v274 = vpop.f32.mrb[0].mxu0
    %v275 = vadd.f32 %v78, %v274
    %v276 = vpop.f32.mrb[0].mxu0
    %v277 = vpop.f32.mrb[0].mxu0
    %v278 = vadd.f32 %v78, %v277
    %v279 = vpop.f32.mrb[0].mxu0
    %280 = vmatprep.mubr.bf16.mxu0 0
    %281 = vmatmul.mubr.bf16.gmra.mrb[0].mxu0 %v147
    %v282 = vpop.f32.mrb[0].mxu0
    %v283 = vadd.f32 %v78, %v282
    %v284 = vpop.f32.mrb[0].mxu0
    %v285 = vpop.f32.mrb[0].mxu0
    %v286 = vadd.f32 %v78, %v285
    %v287 = vpop.f32.mrb[0].mxu0
    %288 = vmatprep.mubr.bf16.mxu0 0
    %289 = vmatmul.mubr.bf16.gmra.mrb[0].mxu0 %v148
    %v290 = vpop.f32.mrb[0].mxu0
    %v291 = vadd.f32 %v78, %v290
    %v292 = vpop.f32.mrb[0].mxu0
    %v293 = vpop.f32.mrb[0].mxu0
    %v294 = vadd.f32 %v78, %v293
    %v295 = vpop.f32.mrb[0].mxu0
    %296 = vmatprep.mubr.bf16.mxu0 0
    %297 = vmatmul.mubr.bf16.gmra.mrb[0].mxu0 %v149
    %v298 = vpop.f32.mrb[0].mxu0
    %v299 = vadd.f32 %v78, %v298
    %v300 = vpop.f32.mrb[0].mxu0
    %v301 = vpop.f32.mrb[0].mxu0
    %v302 = vadd.f32 %v78, %v301
    %v303 = vpop.f32.mrb[0].mxu0
    %304 = vmatprep.mubr.bf16.mxu0 0
    %305 = vmatmul.mubr.bf16.gmra.mrb[0].mxu0 %v150
    %v306 = vpop.f32.mrb[0].mxu0
    %v307 = vadd.f32 %v78, %v306
    %v308 = vpop.f32.mrb[0].mxu0
    %v309 = vpop.f32.mrb[0].mxu0
    %v310 = vadd.f32 %v78, %v309
    %v311 = vpop.f32.mrb[0].mxu0
    %312 = vmatprep.mubr.bf16.mxu0 0
    %313 = vmatmul.mubr.bf16.gmra.mrb[0].mxu0 %v151
    %v314 = vpop.f32.mrb[0].mxu0
    %v315 = vadd.f32 %v78, %v314
    %v316 = vpop.f32.mrb[0].mxu0
    %v317 = vpop.f32.mrb[0].mxu0
    %v318 = vadd.f32 %v78, %v317
    %v319 = vpop.f32.mrb[0].mxu0
    %320 = vmatprep.mubr.bf16.mxu0 0
    %321 = vmatmul.mubr.bf16.gmra.mrb[0].mxu0 %v152
    %v322 = vpop.f32.mrb[0].mxu0
    %v323 = vadd.f32 %v78, %v322
    %v324 = vpop.f32.mrb[0].mxu0
    %v325 = vpop.f32.mrb[0].mxu0
    %v326 = vadd.f32 %v78, %v325
    %v327 = vpop.f32.mrb[0].mxu0
    %328 = vmatprep.mubr.bf16.mxu0 0
    %329 = vmatmul.mubr.bf16.gmra.mrb[0].mxu0 %v153
    %v330 = vpop.f32.mrb[0].mxu0
    %v331 = vadd.f32 %v78, %v330
    %v332 = vpop.f32.mrb[0].mxu0
    %v333 = vpop.f32.mrb[0].mxu0
    %v334 = vadd.f32 %v78, %v333
    %v335 = vpop.f32.mrb[0].mxu0
    %336 = vmatprep.mubr.bf16.mxu0 0
    %337 = vmatmul.mubr.bf16.gmra.mrb[0].mxu0 %v154
    %v338 = vpop.f32.mrb[0].mxu0
    %v339 = vadd.f32 %v78, %v338
    %v340 = vpop.f32.mrb[0].mxu0
    %v341 = vpop.f32.mrb[0].mxu0
    %v342 = vadd.f32 %v78, %v341
    %v343 = vpop.f32.mrb[0].mxu0
    %344 = vmatprep.mubr.bf16.mxu0 0
    %345 = vmatmul.mubr.bf16.gmra.mrb[0].mxu0 %v155
    %v346 = vpop.f32.mrb[0].mxu0
    %v347 = vadd.f32 %v78, %v346
    %v348 = vpop.f32.mrb[0].mxu0
    %v349 = vpop.f32.mrb[0].mxu0
    %v350 = vadd.f32 %v78, %v349
    %v351 = vpop.f32.mrb[0].mxu0
    %352 = vmatprep.mubr.bf16.mxu0 0
    %353 = vmatmul.mubr.bf16.gmra.mrb[0].mxu0 %v156
    %v354 = vpop.f32.mrb[0].mxu0
    %v355 = vadd.f32 %v78, %v354
    %v356 = vpop.f32.mrb[0].mxu0
    %v357 = vpop.f32.mrb[0].mxu0
    %v358 = vadd.f32 %v78, %v357
    %v359 = vpop.f32.mrb[0].mxu0
    %360 = vmatprep.mubr.bf16.mxu0 0
    %361 = vmatmul.mubr.bf16.gmra.mrb[0].mxu0 %v157
    %v362 = vpop.f32.mrb[0].mxu0
    %v363 = vadd.f32 %v78, %v362
    %v364 = vpop.f32.mrb[0].mxu0
    %v365 = vpop.f32.mrb[0].mxu0
    %v366 = vadd.f32 %v78, %v365
    %v367 = vpop.f32.mrb[0].mxu0
    %368 = vmatprep.mubr.bf16.mxu0 0
    %369 = vmatmul.mubr.bf16.gmra.mrb[0].mxu0 %v158
    %v370 = vpop.f32.mrb[0].mxu0
    %v371 = vadd.f32 %v78, %v370
    %v372 = vpop.f32.mrb[0].mxu0
    %v373 = vpop.f32.mrb[0].mxu0
    %v374 = vadd.f32 %v78, %v373
    %v375 = vpop.f32.mrb[0].mxu0
    %376 = vmatprep.mubr.bf16.mxu0 0
    %377 = vmatmul.mubr.bf16.gmra.mrb[0].mxu0 %v159
    %v378 = vpop.f32.mrb[0].mxu0
    %v379 = vadd.f32 %v78, %v378
    %v380 = vpop.f32.mrb[0].mxu0
    %v381 = vpop.f32.mrb[0].mxu0
    %v382 = vadd.f32 %v78, %v381
    %v383 = vpop.f32.mrb[0].mxu0
    %384 = vdwg.mxu0
    %v385 = vtanh.pop %v259
    %v386 = vtanh.pop %v262
    %v387 = vtanh.pop %v267
    %v388 = vtanh.pop %v270
    %v389 = vtanh.pop %v275
    %v390 = vtanh.pop %v278
    %v391 = vtanh.pop %v283
    %v392 = vtanh.pop %v286
    %v393 = vtanh.pop %v291
    %v394 = vtanh.pop %v294
    %v395 = vtanh.pop %v299
    %v396 = vtanh.pop %v302
    %v397 = vtanh.pop %v307
    %v398 = vtanh.pop %v310
    %v399 = vtanh.pop %v315
    %v400 = vtanh.pop %v318
    %v401 = vtanh.pop %v323
    %v402 = vtanh.pop %v326
    %v403 = vtanh.pop %v331
    %v404 = vtanh.pop %v334
    %v405 = vtanh.pop %v339
    %v406 = vtanh.pop %v342
    %v407 = vtanh.pop %v347
    %v408 = vtanh.pop %v350
    %v409 = vtanh.pop %v355
    %v410 = vtanh.pop %v358
    %v411 = vtanh.pop %v363
    %v412 = vtanh.pop %v366
    %v413 = vtanh.pop %v371
    %v414 = vtanh.pop %v374
    %v415 = vtanh.pop %v379
    %v416 = vtanh.pop %v382
    %v417 = vsub.f32 %v259, %v385
    %v418 = vsub.f32 %v262, %v386
    %v419 = vsub.f32 %v267, %v387
    %v420 = vsub.f32 %v270, %v388
    %v421 = vsub.f32 %v275, %v389
    %v422 = vsub.f32 %v278, %v390
    %v423 = vsub.f32 %v283, %v391
    %v424 = vsub.f32 %v286, %v392
    %v425 = vsub.f32 %v291, %v393
    %v426 = vsub.f32 %v294, %v394
    %v427 = vsub.f32 %v299, %v395
    %v428 = vsub.f32 %v302, %v396
    %v429 = vsub.f32 %v307, %v397
    %v430 = vsub.f32 %v310, %v398
    %v431 = vsub.f32 %v315, %v399
    %v432 = vsub.f32 %v318, %v400
    %v433 = vsub.f32 %v323, %v401
    %v434 = vsub.f32 %v326, %v402
    %v435 = vsub.f32 %v331, %v403
    %v436 = vsub.f32 %v334, %v404
    %v437 = vsub.f32 %v339, %v405
    %v438 = vsub.f32 %v342, %v406
    %v439 = vsub.f32 %v347, %v407
    %v440 = vsub.f32 %v350, %v408
    %v441 = vsub.f32 %v355, %v409
    %v442 = vsub.f32 %v358, %v410
    %v443 = vsub.f32 %v363, %v411
    %v444 = vsub.f32 %v366, %v412
    %v445 = vsub.f32 %v371, %v413
    %v446 = vsub.f32 %v374, %v414
    %v447 = vsub.f32 %v379, %v415
    %v448 = vsub.f32 %v382, %v416
    %v449 = vpack.c.bf16 %v418, %v417
    %v450 = vpack.c.bf16 %v420, %v419
    %v451 = vpack.c.bf16 %v422, %v421
    %v452 = vpack.c.bf16 %v424, %v423
    %v453 = vpack.c.bf16 %v426, %v425
    %v454 = vpack.c.bf16 %v428, %v427
    %v455 = vpack.c.bf16 %v430, %v429
    %v456 = vpack.c.bf16 %v432, %v431
    %v457 = vpack.c.bf16 %v434, %v433
    %v458 = vpack.c.bf16 %v436, %v435
    %v459 = vpack.c.bf16 %v438, %v437
    %v460 = vpack.c.bf16 %v440, %v439
    %v461 = vpack.c.bf16 %v442, %v441
    %v462 = vpack.c.bf16 %v444, %v443
    %v463 = vpack.c.bf16 %v446, %v445
    %v464 = vpack.c.bf16 %v448, %v447
    %465 = vst [vmem:[#allocation2] sm:$0xff] %v449
    %466 = vst [vmem:[#allocation2 + $0x8] sm:$0xff] %v450
    %467 = vst [vmem:[#allocation2 + $0x10] sm:$0xff] %v451
    %468 = vst [vmem:[#allocation2 + $0x18] sm:$0xff] %v452
    %469 = vst [vmem:[#allocation2 + $0x20] sm:$0xff] %v453
    %470 = vst [vmem:[#allocation2 + $0x28] sm:$0xff] %v454
    %471 = vst [vmem:[#allocation2 + $0x30] sm:$0xff] %v455
    %472 = vst [vmem:[#allocation2 + $0x38] sm:$0xff] %v456
    %473 = vst [vmem:[#allocation2 + $0x40] sm:$0xff] %v457
    %474 = vst [vmem:[#allocation2 + $0x48] sm:$0xff] %v458
    %475 = vst [vmem:[#allocation2 + $0x50] sm:$0xff] %v459
    %476 = vst [vmem:[#allocation2 + $0x58] sm:$0xff] %v460
    %477 = vst [vmem:[#allocation2 + $0x60] sm:$0xff] %v461
    %478 = vst [vmem:[#allocation2 + $0x68] sm:$0xff] %v462
    %479 = vst [vmem:[#allocation2 + $0x70] sm:$0xff] %v463
    %480 = vst [vmem:[#allocation2 + $0x78] sm:$0xff] %v464
  $region25: #{_head_forward.1} parent=0 // pred_fallthru
    _
  %v481 = vld [vmem:[#allocation2] sm:$0xff]
  %v482 = vld [vmem:[#allocation2 + $0x8] sm:$0xff]
  %v483 = vld [vmem:[#allocation2 + $0x10] sm:$0xff]
  %v484 = vld [vmem:[#allocation2 + $0x18] sm:$0xff]
  %v485 = vld [vmem:[#allocation2 + $0x20] sm:$0xff]
  %v486 = vld [vmem:[#allocation2 + $0x28] sm:$0xff]
  %v487 = vld [vmem:[#allocation2 + $0x30] sm:$0xff]
  %v488 = vld [vmem:[#allocation2 + $0x38] sm:$0xff]
  %v489 = vld [vmem:[#allocation2 + $0x40] sm:$0xff]
  %v490 = vld [vmem:[#allocation2 + $0x48] sm:$0xff]
  %v491 = vld [vmem:[#allocation2 + $0x50] sm:$0xff]
  %v492 = vld [vmem:[#allocation2 + $0x58] sm:$0xff]
  %v493 = vld [vmem:[#allocation2 + $0x60] sm:$0xff]
  %v494 = vld [vmem:[#allocation2 + $0x68] sm:$0xff]
  %v495 = vld [vmem:[#allocation2 + $0x70] sm:$0xff]
  %v496 = vld [vmem:[#allocation2 + $0x78] sm:$0xff]
  %v497 = vld [vmem:[%s3] sm:$0xf]
  %v498 = vld [vmem:[%s3 + $0x4] sm:$0xf]
  %v499 = vld [vmem:[%s3 + $0x8] sm:$0xf]
  %v500 = vld [vmem:[%s3 + $0xc] sm:$0xf]
  %v501 = vld [vmem:[%s3 + $0x10] sm:$0xf]
  %v502 = vld [vmem:[%s3 + $0x14] sm:$0xf]
  %v503 = vld [vmem:[%s3 + $0x18] sm:$0xf]
  %v504 = vld [vmem:[%s3 + $0x1c] sm:$0xf]
  %v505 = vld [vmem:[%s3 + $0x20] sm:$0xf]
  %v506 = vld [vmem:[%s3 + $0x24] sm:$0xf]
  %v507 = vld [vmem:[%s3 + $0x28] sm:$0xf]
  %v508 = vld [vmem:[%s3 + $0x2c] sm:$0xf]
  %v509 = vld [vmem:[%s3 + $0x30] sm:$0xf]
  %v510 = vld [vmem:[%s3 + $0x34] sm:$0xf]
  %v511 = vld [vmem:[%s3 + $0x38] sm:$0xf]
  %v512 = vld [vmem:[%s3 + $0x3c] sm:$0xf]
  %v513 = vld [vmem:[%s4] sm:$0x1]
  %v515 = vlaneseq
  %v516 = vshrl.u32 %v515, 7
  %v517 = vsub.s32 0, %v516
  %v518 = vrot.slane %v513, %v517
  %v536 = vunpack.c.l.b16 %v497
  %v537 = vunpack.c.l.b16 %v498
  %v538 = vunpack.c.l.b16 %v499
  %v539 = vunpack.c.l.b16 %v500
  %v540 = vunpack.c.l.b16 %v501
  %v541 = vunpack.c.l.b16 %v502
  %v542 = vunpack.c.l.b16 %v503
  %v543 = vunpack.c.l.b16 %v504
  %v544 = vunpack.c.l.b16 %v505
  %v545 = vunpack.c.l.b16 %v506
  %v546 = vunpack.c.l.b16 %v507
  %v547 = vunpack.c.l.b16 %v508
  %v548 = vunpack.c.l.b16 %v509
  %v549 = vunpack.c.l.b16 %v510
  %v550 = vunpack.c.l.b16 %v511
  %v551 = vunpack.c.l.b16 %v512
  %v552 = vpack.c.b16 %v537, %v536
  %v553 = vpack.c.b16 %v539, %v538
  %v554 = vpack.c.b16 %v541, %v540
  %v555 = vpack.c.b16 %v543, %v542
  %v556 = vpack.c.b16 %v545, %v544
  %v557 = vpack.c.b16 %v547, %v546
  %v558 = vpack.c.b16 %v549, %v548
  %v559 = vpack.c.b16 %v551, %v550
  %568 = vmatprep.subr.bf16.mxu0 0
  %569 = vmatpush1.bf16.msra.mxu0 %v552
  %570 = vmatprep.subr.bf16.mxu0 0
  %571 = vmatpush1.bf16.msra.mxu0 %v553
  %572 = vmatprep.subr.bf16.mxu0 0
  %573 = vmatpush1.bf16.msra.mxu0 %v554
  %574 = vmatprep.subr.bf16.mxu0 0
  %575 = vmatpush1.bf16.msra.mxu0 %v555
  %576 = vmatprep.subr.bf16.mxu0 0
  %577 = vmatpush1.bf16.msra.mxu0 %v556
  %578 = vmatprep.subr.bf16.mxu0 0
  %579 = vmatpush1.bf16.msra.mxu0 %v557
  %580 = vmatprep.subr.bf16.mxu0 0
  %581 = vmatpush1.bf16.msra.mxu0 %v558
  %582 = vmatprep.subr.bf16.mxu0 0
  %583 = vmatpush1.bf16.msra.mxu0 %v559
  %584 = vmatprep.subr.bf16.mxu0 0
  %585 = vmatpush1.bf16.msra.mxu0 0
  %586 = vmatprep.subr.bf16.mxu0 0
  %587 = vmatpush1.bf16.msra.mxu0 0
  %588 = vmatprep.subr.bf16.mxu0 0
  %589 = vmatpush1.bf16.msra.mxu0 0
  %590 = vmatprep.subr.bf16.mxu0 0
  %591 = vmatpush1.bf16.msra.mxu0 0
  %592 = vmatprep.subr.bf16.mxu0 0
  %593 = vmatpush1.bf16.msra.mxu0 0
  %594 = vmatprep.subr.bf16.mxu0 0
  %595 = vmatpush1.bf16.msra.mxu0 0
  %596 = vmatprep.subr.bf16.mxu0 0
  %597 = vmatpush1.bf16.msra.mxu0 0
  %598 = vmatprep.subr.bf16.mxu0 0
  %599 = vmatpush1.bf16.msra.mxu0 0
  %600 = vmatprep.mubr.bf16.mxu0 0
  %601 = vmatmul.mubr.bf16.gmra.mrb[0].mxu0 %v481
  %v602 = vpop.f32.mrb[0].mxu0
  %v603 = vadd.f32 %v518, %v602
  %v604 = vpop.f32.mrb[0].mxu0
  %v605 = vpop.f32.mrb[0].mxu0
  %v606 = vadd.f32 %v518, %v605
  %v607 = vpop.f32.mrb[0].mxu0
  %608 = vmatprep.mubr.bf16.mxu0 0
  %609 = vmatmul.mubr.bf16.gmra.mrb[0].mxu0 %v482
  %v610 = vpop.f32.mrb[0].mxu0
  %v611 = vadd.f32 %v518, %v610
  %v612 = vpop.f32.mrb[0].mxu0
  %v613 = vpop.f32.mrb[0].mxu0
  %v614 = vadd.f32 %v518, %v613
  %v615 = vpop.f32.mrb[0].mxu0
  %616 = vmatprep.mubr.bf16.mxu0 0
  %617 = vmatmul.mubr.bf16.gmra.mrb[0].mxu0 %v483
  %v618 = vpop.f32.mrb[0].mxu0
  %v619 = vadd.f32 %v518, %v618
  %v620 = vpop.f32.mrb[0].mxu0
  %v621 = vpop.f32.mrb[0].mxu0
  %v622 = vadd.f32 %v518, %v621
  %v623 = vpop.f32.mrb[0].mxu0
  %624 = vmatprep.mubr.bf16.mxu0 0
  %625 = vmatmul.mubr.bf16.gmra.mrb[0].mxu0 %v484
  %v626 = vpop.f32.mrb[0].mxu0
  %v627 = vadd.f32 %v518, %v626
  %v628 = vpop.f32.mrb[0].mxu0
  %v629 = vpop.f32.mrb[0].mxu0
  %v630 = vadd.f32 %v518, %v629
  %v631 = vpop.f32.mrb[0].mxu0
  %632 = vmatprep.mubr.bf16.mxu0 0
  %633 = vmatmul.mubr.bf16.gmra.mrb[0].mxu0 %v485
  %v634 = vpop.f32.mrb[0].mxu0
  %v635 = vadd.f32 %v518, %v634
  %v636 = vpop.f32.mrb[0].mxu0
  %v637 = vpop.f32.mrb[0].mxu0
  %v638 = vadd.f32 %v518, %v637
  %v639 = vpop.f32.mrb[0].mxu0
  %640 = vmatprep.mubr.bf16.mxu0 0
  %641 = vmatmul.mubr.bf16.gmra.mrb[0].mxu0 %v486
  %v642 = vpop.f32.mrb[0].mxu0
  %v643 = vadd.f32 %v518, %v642
  %v644 = vpop.f32.mrb[0].mxu0
  %v645 = vpop.f32.mrb[0].mxu0
  %v646 = vadd.f32 %v518, %v645
  %v647 = vpop.f32.mrb[0].mxu0
  %648 = vmatprep.mubr.bf16.mxu0 0
  %649 = vmatmul.mubr.bf16.gmra.mrb[0].mxu0 %v487
  %v650 = vpop.f32.mrb[0].mxu0
  %v651 = vadd.f32 %v518, %v650
  %v652 = vpop.f32.mrb[0].mxu0
  %v653 = vpop.f32.mrb[0].mxu0
  %v654 = vadd.f32 %v518, %v653
  %v655 = vpop.f32.mrb[0].mxu0
  %656 = vmatprep.mubr.bf16.mxu0 0
  %657 = vmatmul.mubr.bf16.gmra.mrb[0].mxu0 %v488
  %v658 = vpop.f32.mrb[0].mxu0
  %v659 = vadd.f32 %v518, %v658
  %v660 = vpop.f32.mrb[0].mxu0
  %v661 = vpop.f32.mrb[0].mxu0
  %v662 = vadd.f32 %v518, %v661
  %v663 = vpop.f32.mrb[0].mxu0
  %664 = vmatprep.mubr.bf16.mxu0 0
  %665 = vmatmul.mubr.bf16.gmra.mrb[0].mxu0 %v489
  %v666 = vpop.f32.mrb[0].mxu0
  %v667 = vadd.f32 %v518, %v666
  %v668 = vpop.f32.mrb[0].mxu0
  %v669 = vpop.f32.mrb[0].mxu0
  %v670 = vadd.f32 %v518, %v669
  %v671 = vpop.f32.mrb[0].mxu0
  %672 = vmatprep.mubr.bf16.mxu0 0
  %673 = vmatmul.mubr.bf16.gmra.mrb[0].mxu0 %v490
  %v674 = vpop.f32.mrb[0].mxu0
  %v675 = vadd.f32 %v518, %v674
  %v676 = vpop.f32.mrb[0].mxu0
  %v677 = vpop.f32.mrb[0].mxu0
  %v678 = vadd.f32 %v518, %v677
  %v679 = vpop.f32.mrb[0].mxu0
  %680 = vmatprep.mubr.bf16.mxu0 0
  %681 = vmatmul.mubr.bf16.gmra.mrb[0].mxu0 %v491
  %v682 = vpop.f32.mrb[0].mxu0
  %v683 = vadd.f32 %v518, %v682
  %v684 = vpop.f32.mrb[0].mxu0
  %v685 = vpop.f32.mrb[0].mxu0
  %v686 = vadd.f32 %v518, %v685
  %v687 = vpop.f32.mrb[0].mxu0
  %688 = vmatprep.mubr.bf16.mxu0 0
  %689 = vmatmul.mubr.bf16.gmra.mrb[0].mxu0 %v492
  %v690 = vpop.f32.mrb[0].mxu0
  %v691 = vadd.f32 %v518, %v690
  %v692 = vpop.f32.mrb[0].mxu0
  %v693 = vpop.f32.mrb[0].mxu0
  %v694 = vadd.f32 %v518, %v693
  %v695 = vpop.f32.mrb[0].mxu0
  %696 = vmatprep.mubr.bf16.mxu0 0
  %697 = vmatmul.mubr.bf16.gmra.mrb[0].mxu0 %v493
  %v698 = vpop.f32.mrb[0].mxu0
  %v699 = vadd.f32 %v518, %v698
  %v700 = vpop.f32.mrb[0].mxu0
  %v701 = vpop.f32.mrb[0].mxu0
  %v702 = vadd.f32 %v518, %v701
  %v703 = vpop.f32.mrb[0].mxu0
  %704 = vmatprep.mubr.bf16.mxu0 0
  %705 = vmatmul.mubr.bf16.gmra.mrb[0].mxu0 %v494
  %v706 = vpop.f32.mrb[0].mxu0
  %v707 = vadd.f32 %v518, %v706
  %v708 = vpop.f32.mrb[0].mxu0
  %v709 = vpop.f32.mrb[0].mxu0
  %v710 = vadd.f32 %v518, %v709
  %v711 = vpop.f32.mrb[0].mxu0
  %712 = vmatprep.mubr.bf16.mxu0 0
  %713 = vmatmul.mubr.bf16.gmra.mrb[0].mxu0 %v495
  %v714 = vpop.f32.mrb[0].mxu0
  %v715 = vadd.f32 %v518, %v714
  %v716 = vpop.f32.mrb[0].mxu0
  %v717 = vpop.f32.mrb[0].mxu0
  %v718 = vadd.f32 %v518, %v717
  %v719 = vpop.f32.mrb[0].mxu0
  %720 = vmatprep.mubr.bf16.mxu0 0
  %721 = vmatmul.mubr.bf16.gmra.mrb[0].mxu0 %v496
  %v722 = vpop.f32.mrb[0].mxu0
  %v723 = vadd.f32 %v518, %v722
  %v724 = vpop.f32.mrb[0].mxu0
  %v725 = vpop.f32.mrb[0].mxu0
  %v726 = vadd.f32 %v518, %v725
  %v727 = vpop.f32.mrb[0].mxu0
  %728 = vdwg.mxu0
  %729 = vst [vmem:[%s5] sm:$0xff] %v603
  %730 = vst [vmem:[%s5 + $0x8] sm:$0xff] %v606
  %731 = vst [vmem:[%s5 + $0x10] sm:$0xff] %v611
  %732 = vst [vmem:[%s5 + $0x18] sm:$0xff] %v614
  %733 = vst [vmem:[%s5 + $0x20] sm:$0xff] %v619
  %734 = vst [vmem:[%s5 + $0x28] sm:$0xff] %v622
  %735 = vst [vmem:[%s5 + $0x30] sm:$0xff] %v627
  %736 = vst [vmem:[%s5 + $0x38] sm:$0xff] %v630
  %737 = vst [vmem:[%s5 + $0x40] sm:$0xff] %v635
  %738 = vst [vmem:[%s5 + $0x48] sm:$0xff] %v638
  %739 = vst [vmem:[%s5 + $0x50] sm:$0xff] %v643
  %740 = vst [vmem:[%s5 + $0x58] sm:$0xff] %v646
  %741 = vst [vmem:[%s5 + $0x60] sm:$0xff] %v651
  %742 = vst [vmem:[%s5 + $0x68] sm:$0xff] %v654
  %743 = vst [vmem:[%s5 + $0x70] sm:$0xff] %v659
  %744 = vst [vmem:[%s5 + $0x78] sm:$0xff] %v662
  %745 = vst [vmem:[%s5 + $0x80] sm:$0xff] %v667
  %746 = vst [vmem:[%s5 + $0x88] sm:$0xff] %v670
  %747 = vst [vmem:[%s5 + $0x90] sm:$0xff] %v675
  %748 = vst [vmem:[%s5 + $0x98] sm:$0xff] %v678
  %749 = vst [vmem:[%s5 + $0xa0] sm:$0xff] %v683
  %750 = vst [vmem:[%s5 + $0xa8] sm:$0xff] %v686
  %751 = vst [vmem:[%s5 + $0xb0] sm:$0xff] %v691
  %752 = vst [vmem:[%s5 + $0xb8] sm:$0xff] %v694
  %753 = vst [vmem:[%s5 + $0xc0] sm:$0xff] %v699
  %754 = vst [vmem:[%s5 + $0xc8] sm:$0xff] %v702
  %755 = vst [vmem:[%s5 + $0xd0] sm:$0xff] %v707
  %756 = vst [vmem:[%s5 + $0xd8] sm:$0xff] %v710
  %757 = vst [vmem:[%s5 + $0xe0] sm:$0xff] %v715
  %758 = vst [vmem:[%s5 + $0xe8] sm:$0xff] %v718
  %759 = vst [vmem:[%s5 + $0xf0] sm:$0xff] %v723
  %760 = vst [vmem:[%s5 + $0xf8] sm:$0xff] %v726
  // Predicated region
  $region26: #{_head_forward.1} parent=0 // pred_check
    _
  $region27: #{_head_forward.1} parent=0 // pred_check_branch
    %762 = sbr.rel (0) target = $region29
  $region28: #{_head_forward.1} parent=0 // pred_region
    _
  $region29: #{_head_forward.1} parent=0 // pred_fallthru
    _
  // Predicated region
  $region30: #{_head_forward.1} parent=0 // pred_check
    _
  $region31: #{_head_forward.1} parent=0 // pred_check_branch
    %764 = sbr.rel (0) target = $region33
  $region32: #{_head_forward.1} parent=0 // pred_region
    _
  $region33: #{_head_forward.1} parent=0 // pred_fallthru
    _

</llo_original>
